<compile_context>
chip_gen: v5e
topology: v5e:2x2
jax: 0.10.0
libtpu: 0.0.40
codegen_flags: <defaults>
</compile_context>

<pallas_src>
import functools

import jax
import jax.numpy as jnp
from jax import lax
from jax.experimental import pallas as pl
from jax.experimental.pallas import tpu as pltpu


def _round_up(a: int, b: int) -> int:
    return -(-a // b) * b


def downsample_kernel(tap_ref, w_ref, bias_ref, out_ref, *,
                      cin, cin_pad, cout, n_dirty):
    # tap_ref : (1, 9*cin_pad, hw) bf16. -inf marks spatial-halo positions in
    #           the leading n_dirty tap groups; padded channels / HW tail = 0.
    # w_ref   : (cout, 9*cin_pad) bf16, BN scale folded in.
    # bias_ref: (cout, 1) f32 folded BN bias.
    # out_ref : (1, cout+cin, hw) f32 fused output (conv rows, then pool rows).
    k_total = w_ref.shape[1]
    kd = n_dirty * cin_pad            # dirty (padding-capable) K block size

    # ---- conv branch ------------------------------------------------------
    # Dirty block: -inf halo taps become 0 => zero-padded convolution.
    dirty = tap_ref[0, :kd, :]
    dirty = jnp.where(dirty == -jnp.inf, jnp.zeros_like(dirty), dirty)
    acc = jnp.dot(w_ref[:, :kd], dirty, preferred_element_type=jnp.float32)
    if kd < k_total:                  # clean block: no halo, feed MXU raw
        acc = acc + jnp.dot(w_ref[:, kd:], tap_ref[0, kd:, :],
                            preferred_element_type=jnp.float32)
    conv = jnp.maximum(acc + bias_ref[...], 0.0)          # folded BN + ReLU
    out_ref[0, :cout, :] = conv.astype(out_ref.dtype)

    # ---- pool branch ------------------------------------------------------
    # 9-tap max over the raw (-inf halo) slab; the center tap is always in
    # bounds, so -inf never wins in a real output column.
    pool = tap_ref[0, :cin, :]
    for t in range(1, 9):
        pool = jnp.maximum(pool, tap_ref[0, t * cin_pad:t * cin_pad + cin, :])
    out_ref[0, cout:, :] = pool.astype(out_ref.dtype)


def downsample_forward(x_nchw, w_oihw, gamma, beta, run_mean, run_var, eps=1e-3):
    """x_nchw: (N, Cin, H, W) float32. Returns (N, Cout+Cin, Ho, Wo) float32."""
    N, Cin, H, W = x_nchw.shape
    Cout = w_oihw.shape[0]
    Ho = (H - 1) // 2 + 1
    Wo = (W - 1) // 2 + 1
    HW = Ho * Wo
    Ctot = Cout + Cin
    Cin_pad = _round_up(Cin, 16)          # bf16 packed-sublane alignment
    K = 9 * Cin_pad

    # Taps that can read the spatial halo ("dirty") go first on the K axis.
    pad_ky = (0,) + ((2,) if H % 2 else ())
    pad_kx = (0,) + ((2,) if W % 2 else ())
    coords = [(ky, kx) for ky in range(3) for kx in range(3)]
    dirty_taps = [c for c in coords if c[0] in pad_ky or c[1] in pad_kx]
    clean_taps = [c for c in coords if c not in dirty_taps]
    tap_order = dirty_taps + clean_taps
    n_dirty = len(dirty_taps)

    # ---- VMEM budget & HW tiling (v7x-safe defaults) -----------------------
    big_vmem = False
    try:
        info = pltpu.get_tpu_info()
        big_vmem = getattr(info, "vmem_capacity_bytes", 0) >= 100 * 2**20
    except Exception:
        big_vmem = False
    budget = (44 if big_vmem else 18) * 2**20          # block working set
    vmem_limit = (80 if big_vmem else 32) * 2**20
    per_col = 2 * (K * 2) + 2 * (Ctot * 4)             # dbuf taps + dbuf out
    vmem_cols = max(128, budget // per_col)
    if HW <= min(2048, vmem_cols):
        hw_tile, HW_pad = HW, HW                       # no padding, no slice
    else:
        cap = max(128, min(1024, (vmem_cols // 128) * 128))
        cands = range(128, cap + 1, 128)
        hw_tile = min(cands, key=lambda c: (_round_up(HW, c), -c))
        HW_pad = _round_up(HW, hw_tile)

    # ---- glue: bf16, -inf-halo tap slab, channel-major (9*Cin_pad, HW) -----
    # TODO(synk): fold the im2col halo gather into the kernel (row-halo
    # BlockSpec + in-kernel strided slices) to cut input-side HBM bytes ~3x.
    xb = x_nchw.astype(jnp.bfloat16)
    xp = jnp.pad(xb, ((0, 0), (0, 0), (1, 1), (1, 1)),
                 constant_values=-jnp.inf)                       # (N,Cin,H+2,W+2)
    taps = jnp.stack(
        [xp[:, :, ky:ky + 2 * Ho:2, kx:kx + 2 * Wo:2] for ky, kx in tap_order],
        axis=1)                                                  # (N,9,Cin,Ho,Wo)
    if Cin_pad != Cin:
        taps = jnp.pad(taps, ((0, 0), (0, 0), (0, Cin_pad - Cin),
                              (0, 0), (0, 0)))                   # zero channels
    taps = taps.reshape(N, K, HW)
    if HW_pad != HW:
        taps = jnp.pad(taps, ((0, 0), (0, 0), (0, HW_pad - HW)))  # zero tail

    # ---- weights: (Cout,Cin,3,3) -> (Cout, 9*Cin_pad), BN folded -----------
    scale = gamma / jnp.sqrt(run_var + eps)                      # (Cout,)
    bias = (beta - run_mean * scale).astype(jnp.float32).reshape(Cout, 1)
    w_s = w_oihw * scale[:, None, None, None]
    w_taps = jnp.stack([w_s[:, :, ky, kx] for ky, kx in tap_order], axis=1)
    if Cin_pad != Cin:
        w_taps = jnp.pad(w_taps, ((0, 0), (0, 0), (0, Cin_pad - Cin)))
    w_mat = w_taps.reshape(Cout, K).astype(jnp.bfloat16)

    kernel = functools.partial(downsample_kernel, cin=Cin, cin_pad=Cin_pad,
                               cout=Cout, n_dirty=n_dirty)
    grid = (N, HW_pad // hw_tile)

    fused = pl.pallas_call(
        kernel,
        out_shape=jax.ShapeDtypeStruct((N, Ctot, HW_pad), jnp.float32),
        grid_spec=pltpu.PrefetchScalarGridSpec(
            num_scalar_prefetch=0,
            grid=grid,
            in_specs=[
                pl.BlockSpec((1, K, hw_tile), lambda n, h: (n, 0, h)),
                # NOTE: weight/bias index maps are constant; pl.Buffered(1)
                # would halve their VMEM footprint on v7x if supported.
                pl.BlockSpec((Cout, K), lambda n, h: (0, 0)),
                pl.BlockSpec((Cout, 1), lambda n, h: (0, 0)),
            ],
            out_specs=pl.BlockSpec((1, Ctot, hw_tile), lambda n, h: (n, 0, h)),
        ),
        compiler_params=pltpu.CompilerParams(
            dimension_semantics=("parallel", "parallel"),
            vmem_limit_bytes=vmem_limit),
    )(taps, w_mat, bias)

    if HW_pad != HW:
        fused = fused[:, :, :HW]
    return fused.reshape(N, Ctot, Ho, Wo)


def _reference(x_nchw, w_oihw, gamma, beta, run_mean, run_var, eps=1e-3):
    """Plain-JAX f32 reference mirroring the PyTorch forward (eval mode)."""
    conv = lax.conv_general_dilated(
        x_nchw, w_oihw, window_strides=(2, 2), padding=((1, 1), (1, 1)),
        dimension_numbers=("NCHW", "OIHW", "NCHW"))
    scale = (gamma / jnp.sqrt(run_var + eps)).reshape(1, -1, 1, 1)
    bias = (beta - run_mean * gamma / jnp.sqrt(run_var + eps)).reshape(1, -1, 1, 1)
    b1 = jnp.maximum(conv * scale + bias, 0.0)
    b2 = lax.reduce_window(
        x_nchw, -jnp.inf, lax.max,
        window_dimensions=(1, 1, 3, 3), window_strides=(1, 1, 2, 2),
        padding=((0, 0), (0, 0), (1, 1), (1, 1)))
    return jnp.concatenate([b1, b2], axis=1)


if __name__ == "__main__":
    key = jax.random.PRNGKey(0)
    N, Cin, H, W = 2, 4, 16, 16
    Cout = 8  # ch3x3

    k1, k2, k3, k4, k5, k6 = jax.random.split(key, 6)
    x = jax.random.normal(k1, (N, Cin, H, W), dtype=jnp.float32)
    w = jax.random.normal(k2, (Cout, Cin, 3, 3), dtype=jnp.float32) * 0.1
    gamma = 1.0 + 0.1 * jax.random.normal(k3, (Cout,), dtype=jnp.float32)
    beta = 0.1 * jax.random.normal(k4, (Cout,), dtype=jnp.float32)
    run_mean = 0.1 * jax.random.normal(k5, (Cout,), dtype=jnp.float32)
    run_var = jax.random.uniform(k6, (Cout,), minval=0.5, maxval=1.5,
                                 dtype=jnp.float32)

    out = downsample_forward(x, w, gamma, beta, run_mean, run_var)
    out = jax.block_until_ready(out)

    ref = _reference(x, w, gamma, beta, run_mean, run_var)
    assert out.shape == (N, Cout + Cin, H // 2, W // 2), out.shape
    # bf16 taps/weights with f32 accumulation: validate at ~1e-2 tolerance.
    assert jnp.allclose(out, ref, rtol=2e-2, atol=2e-2), "mismatch vs reference"

    print("KERNEL_OK")
</pallas_src>

<mosaic_0001>
module attributes {stable_mosaic.version = 11 : i64} {
  func.func @downsample_kernel(%arg0: i32, %arg1: i32, %arg2: memref<1x144x64xbf16, #tpu.memory_space<vmem>>, %arg3: memref<8x144xbf16, #tpu.memory_space<vmem>>, %arg4: memref<8x1xf32, #tpu.memory_space<vmem>>, %arg5: memref<1x12x64xf32, #tpu.memory_space<vmem>>) attributes {dimension_semantics = [#tpu.dimension_semantics<parallel>, #tpu.dimension_semantics<parallel>], iteration_bounds = array<i64: 2, 1>, scalar_prefetch = 0 : i64, scratch_operands = 0 : i64, tpu.core_type = #tpu.core_type<tc>, window_params = [{transform_indices = @transform_0, window_bounds = array<i64: 1, 144, 64>}, {pipeline_mode = #tpu.pipeline_mode<synchronous>, transform_indices = @transform_1, window_bounds = array<i64: 8, 144>}, {pipeline_mode = #tpu.pipeline_mode<synchronous>, transform_indices = @transform_2, window_bounds = array<i64: 8, 1>}, {transform_indices = @transform_3, window_bounds = array<i64: 1, 12, 64>}]} {
    %c0 = arith.constant 0 : index
    %c0_0 = arith.constant 0 : index
    %c0_1 = arith.constant 0 : index
    %0 = vector.load %arg2[%c0, %c0_0, %c0_1] : memref<1x144x64xbf16, #tpu.memory_space<vmem>>, vector<1x80x64xbf16>
    %1 = vector.shape_cast %0 : vector<1x80x64xbf16> to vector<80x64xbf16>
    %cst = arith.constant 0xFF80 : bf16
    %2 = vector.broadcast %cst : bf16 to vector<80x64xbf16>
    %3 = arith.cmpf oeq, %1, %2 : vector<80x64xbf16>
    %cst_2 = arith.constant 0.000000e+00 : bf16
    %4 = vector.broadcast %cst_2 : bf16 to vector<80x64xbf16>
    %5 = arith.select %3, %4, %1 : vector<80x64xi1>, vector<80x64xbf16>
    %c0_3 = arith.constant 0 : index
    %c0_4 = arith.constant 0 : index
    %6 = vector.load %arg3[%c0_3, %c0_4] : memref<8x144xbf16, #tpu.memory_space<vmem>>, vector<8x80xbf16>
    %cst_5 = arith.constant dense<0.000000e+00> : vector<8x64xf32>
    %7 = tpu.matmul %6, %5, %cst_5 {dimension_numbers = #tpu.dot_dimension_numbers<[1], [0], [0], [1], [0, 0, 1, 1], [], []>} : vector<8x80xbf16>, vector<80x64xbf16>, vector<8x64xf32> -> vector<8x64xf32>
    %c0_6 = arith.constant 0 : index
    %c80 = arith.constant 80 : index
    %8 = vector.load %arg3[%c0_6, %c80] : memref<8x144xbf16, #tpu.memory_space<vmem>>, vector<8x64xbf16>
    %c0_7 = arith.constant 0 : index
    %c80_8 = arith.constant 80 : index
    %c0_9 = arith.constant 0 : index
    %9 = vector.load %arg2[%c0_7, %c80_8, %c0_9] : memref<1x144x64xbf16, #tpu.memory_space<vmem>>, vector<1x64x64xbf16>
    %10 = vector.shape_cast %9 : vector<1x64x64xbf16> to vector<64x64xbf16>
    %cst_10 = arith.constant dense<0.000000e+00> : vector<8x64xf32>
    %11 = tpu.matmul %8, %10, %cst_10 {dimension_numbers = #tpu.dot_dimension_numbers<[1], [0], [0], [1], [0, 0, 1, 1], [], []>} : vector<8x64xbf16>, vector<64x64xbf16>, vector<8x64xf32> -> vector<8x64xf32>
    %12 = arith.addf %7, %11 : vector<8x64xf32>
    %c0_11 = arith.constant 0 : index
    %c0_12 = arith.constant 0 : index
    %13 = vector.load %arg4[%c0_11, %c0_12] : memref<8x1xf32, #tpu.memory_space<vmem>>, vector<8x1xf32>
    %14 = vector.broadcast %13 : vector<8x1xf32> to vector<8x64xf32>
    %15 = arith.addf %12, %14 : vector<8x64xf32>
    %cst_13 = arith.constant 0.000000e+00 : f32
    %16 = vector.broadcast %cst_13 : f32 to vector<8x64xf32>
    %17 = arith.maximumf %15, %16 : vector<8x64xf32>
    %c0_14 = arith.constant 0 : index
    %c0_15 = arith.constant 0 : index
    %c0_16 = arith.constant 0 : index
    %18 = vector.load %arg5[%c0_14, %c0_15, %c0_16] : memref<1x12x64xf32, #tpu.memory_space<vmem>>, vector<1x8x64xf32>
    %19 = vector.shape_cast %18 : vector<1x8x64xf32> to vector<8x64xf32>
    %20 = vector.shape_cast %17 : vector<8x64xf32> to vector<1x8x64xf32>
    tpu.vector_store %arg5[%c0_14, %c0_15, %c0_16], %20 {strides = array<i32>} : memref<1x12x64xf32, #tpu.memory_space<vmem>>, vector<1x8x64xf32>,
    %c0_17 = arith.constant 0 : index
    %c0_18 = arith.constant 0 : index
    %c0_19 = arith.constant 0 : index
    %21 = vector.load %arg2[%c0_17, %c0_18, %c0_19] : memref<1x144x64xbf16, #tpu.memory_space<vmem>>, vector<1x4x64xbf16>
    %22 = vector.shape_cast %21 : vector<1x4x64xbf16> to vector<4x64xbf16>
    %c0_20 = arith.constant 0 : index
    %c16 = arith.constant 16 : index
    %c0_21 = arith.constant 0 : index
    %23 = vector.load %arg2[%c0_20, %c16, %c0_21] : memref<1x144x64xbf16, #tpu.memory_space<vmem>>, vector<1x4x64xbf16>
    %24 = vector.shape_cast %23 : vector<1x4x64xbf16> to vector<4x64xbf16>
    %25 = arith.maximumf %22, %24 : vector<4x64xbf16>
    %c0_22 = arith.constant 0 : index
    %c32 = arith.constant 32 : index
    %c0_23 = arith.constant 0 : index
    %26 = vector.load %arg2[%c0_22, %c32, %c0_23] : memref<1x144x64xbf16, #tpu.memory_space<vmem>>, vector<1x4x64xbf16>
    %27 = vector.shape_cast %26 : vector<1x4x64xbf16> to vector<4x64xbf16>
    %28 = arith.maximumf %25, %27 : vector<4x64xbf16>
    %c0_24 = arith.constant 0 : index
    %c48 = arith.constant 48 : index
    %c0_25 = arith.constant 0 : index
    %29 = vector.load %arg2[%c0_24, %c48, %c0_25] : memref<1x144x64xbf16, #tpu.memory_space<vmem>>, vector<1x4x64xbf16>
    %30 = vector.shape_cast %29 : vector<1x4x64xbf16> to vector<4x64xbf16>
    %31 = arith.maximumf %28, %30 : vector<4x64xbf16>
    %c0_26 = arith.constant 0 : index
    %c64 = arith.constant 64 : index
    %c0_27 = arith.constant 0 : index
    %32 = vector.load %arg2[%c0_26, %c64, %c0_27] : memref<1x144x64xbf16, #tpu.memory_space<vmem>>, vector<1x4x64xbf16>
    %33 = vector.shape_cast %32 : vector<1x4x64xbf16> to vector<4x64xbf16>
    %34 = arith.maximumf %31, %33 : vector<4x64xbf16>
    %c0_28 = arith.constant 0 : index
    %c80_29 = arith.constant 80 : index
    %c0_30 = arith.constant 0 : index
    %35 = vector.load %arg2[%c0_28, %c80_29, %c0_30] : memref<1x144x64xbf16, #tpu.memory_space<vmem>>, vector<1x4x64xbf16>
    %36 = vector.shape_cast %35 : vector<1x4x64xbf16> to vector<4x64xbf16>
    %37 = arith.maximumf %34, %36 : vector<4x64xbf16>
    %c0_31 = arith.constant 0 : index
    %c96 = arith.constant 96 : index
    %c0_32 = arith.constant 0 : index
    %38 = vector.load %arg2[%c0_31, %c96, %c0_32] : memref<1x144x64xbf16, #tpu.memory_space<vmem>>, vector<1x4x64xbf16>
    %39 = vector.shape_cast %38 : vector<1x4x64xbf16> to vector<4x64xbf16>
    %40 = arith.maximumf %37, %39 : vector<4x64xbf16>
    %c0_33 = arith.constant 0 : index
    %c112 = arith.constant 112 : index
    %c0_34 = arith.constant 0 : index
    %41 = vector.load %arg2[%c0_33, %c112, %c0_34] : memref<1x144x64xbf16, #tpu.memory_space<vmem>>, vector<1x4x64xbf16>
    %42 = vector.shape_cast %41 : vector<1x4x64xbf16> to vector<4x64xbf16>
    %43 = arith.maximumf %40, %42 : vector<4x64xbf16>
    %c0_35 = arith.constant 0 : index
    %c128 = arith.constant 128 : index
    %c0_36 = arith.constant 0 : index
    %44 = vector.load %arg2[%c0_35, %c128, %c0_36] : memref<1x144x64xbf16, #tpu.memory_space<vmem>>, vector<1x4x64xbf16>
    %45 = vector.shape_cast %44 : vector<1x4x64xbf16> to vector<4x64xbf16>
    %46 = arith.maximumf %43, %45 : vector<4x64xbf16>
    %47 = arith.extf %46 : vector<4x64xbf16> to vector<4x64xf32>
    %c0_37 = arith.constant 0 : index
    %c8 = arith.constant 8 : index
    %c0_38 = arith.constant 0 : index
    %48 = vector.load %arg5[%c0_37, %c8, %c0_38] : memref<1x12x64xf32, #tpu.memory_space<vmem>>, vector<1x4x64xf32>
    %49 = vector.shape_cast %48 : vector<1x4x64xf32> to vector<4x64xf32>
    %50 = vector.shape_cast %47 : vector<4x64xf32> to vector<1x4x64xf32>
    tpu.vector_store %arg5[%c0_37, %c8, %c0_38], %50 {strides = array<i32>} : memref<1x12x64xf32, #tpu.memory_space<vmem>>, vector<1x4x64xf32>,
    return
  }
  func.func @transform_0(%arg0: i32, %arg1: i32) -> (i32, i32, i32) {
    %c0_i32 = arith.constant 0 : i32
    %c0_i32_0 = arith.constant 0 : i32
    return %arg0, %c0_i32, %arg1 : i32, i32, i32
  }
  func.func @transform_1(%arg0: i32, %arg1: i32) -> (i32, i32) {
    %c0_i32 = arith.constant 0 : i32
    %c0_i32_0 = arith.constant 0 : i32
    %c0_i32_1 = arith.constant 0 : i32
    return %c0_i32, %c0_i32_0 : i32, i32
  }
  func.func @transform_2(%arg0: i32, %arg1: i32) -> (i32, i32) {
    %c0_i32 = arith.constant 0 : i32
    %c0_i32_0 = arith.constant 0 : i32
    %c0_i32_1 = arith.constant 0 : i32
    return %c0_i32, %c0_i32_0 : i32, i32
  }
  func.func @transform_3(%arg0: i32, %arg1: i32) -> (i32, i32, i32) {
    %c0_i32 = arith.constant 0 : i32
    %c0_i32_0 = arith.constant 0 : i32
    return %arg0, %c0_i32, %arg1 : i32, i32, i32
  }
}

</mosaic_0001>

<llo_original>
// kernel: tpu_custom_call.1
$region0: #{tpu_custom_call.1}
  #allocation0 [shape = 'u32[]', space=smem, size = 0x4, offset = 0x4, fixed_abs, tag = 'smem constant byte address 0x4 - core index']
  #allocation1 [shape = 'u32[72,128]{1,0:T(1,128)}', space=vmem, size = 0x9000, scoped, tag = 'internal scratch']
  %s0 = inlined_call_operand.vmem [shape: bf16[2,144,64], index: 0, kind: input, shape index: {}]
  %s1 = inlined_call_operand.vmem [shape: bf16[8,144], index: 1, kind: input, shape index: {}]
  %s2 = inlined_call_operand.vmem [shape: f32[8,1], index: 2, kind: input, shape index: {}]
  %s3 = inlined_call_operand.vmem [shape: f32[2,12,64], index: 3, kind: output, shape index: {}]
  %s4 = sld [smem:[#allocation0]]
  $region45: #{tpu_custom_call.1} parent=0
    _
  %s6 = ssub.s32 1, %s4
  %s7 = scalar_select 0, %s6, %s4
  loop: start=0, step=1, limit=4
  $region2: #{tpu_custom_call.1} parent=0 // loop_pre_header
    _
  $region3: #{tpu_custom_call.1} parent=0 // loop_header
    %s9 = sphi 0, %s13
    %p10 = scmp.ge.s32.totalorder %s9, 4
    %s16 = sphi 0, %s28
    %s17 = sphi 0, %s24
    %s18 = sphi 0, %s16
    %s19 = sphi 0, %s17
    %s20 = sphi 0, %s18
    %s21 = sphi 0, %s19
    %s33 = sphi 0, %s35
    %s36 = sphi 0, %s33
    %s37 = sphi 0, %s36
    %s53 = sphi 0, %s37
    %s57 = sphi 0, %s57
    %s59 = sphi 0, %s57
    %s60 = sphi 0, %s59
    %s74 = sphi 0, %s60
    %s78 = sphi 0, %s78
    %s80 = sphi 0, %s78
    %s81 = sphi 0, %s80
    %s95 = sphi 0, %s81
    %s103 = sphi 0, %s105
    %s106 = sphi 0, %s103
    %s107 = sphi 0, %s106
    %s123 = sphi 0, %s107
  $region4: #{tpu_custom_call.1} parent=0 // loop_header_branch
    %12 = sbr.rel (%p10) target = $region8
  $region5: #{tpu_custom_call.1} parent=0 // loop_body
    %s14 = ssub.s32 %s9, 1
    %s15 = ssub.s32 %s9, 2
    %s22 = sadd.s32 1, %s17
    %p23 = scmp.ge.s32.totalorder %s22, 1
    %s24 = scalar_select %p23, 0, %s22
    %s25 = sadd.s32 1, %s16
    %s26 = scalar_select %p23, %s25, %s16
    %p27 = scmp.ge.s32.totalorder %s26, 2
    %s28 = scalar_select %p27, 0, %s26
    %s29 = ssub.s32 %s16, %s28
    %s30 = ssub.s32 %s17, %s24
    %s31 = sor.u32 %s29, %s30
    %p32 = scmp.eq.s32.totalorder %s31, 0
    %s34 = sadd.s32 %s33, 1
    %s35 = scalar_select %p32, %s33, %s34
    %p38 = pneg %p32
    %p39 = scmp.eq.s32.totalorder %s9, 1
    %p40 = por %p38, %p39
    %p41 = scmp.ne.s32.totalorder %s33, %s36
    %p42 = scmp.eq.s32.totalorder %s9, 0
    %p43 = por %p41, %p42
    %p44 = scmp.ne.s32.totalorder %s33, %s36
    %p45 = scmp.eq.s32.totalorder %s14, 1
    %p46 = por %p44, %p45
    %p47 = scmp.ne.s32.totalorder %s36, %s37
    %p48 = scmp.eq.s32.totalorder %s14, 0
    %p49 = por %p47, %p48
    %p50 = scmp.ne.s32.totalorder %s36, %s37
    %p51 = scmp.eq.s32.totalorder %s15, 1
    %p52 = por %p50, %p51
    %p54 = scmp.ne.s32.totalorder %s37, %s53
    %p55 = scmp.eq.s32.totalorder %s15, 0
    %p56 = por %p54, %p55
    %s58 = sadd.s32 %s57, 1
    %p61 = scmp.eq.s32.totalorder %s9, 1
    %p62 = scmp.ne.s32.totalorder %s57, %s59
    %p63 = scmp.eq.s32.totalorder %s9, 0
    %p64 = por %p62, %p63
    %p65 = scmp.ne.s32.totalorder %s57, %s59
    %p66 = scmp.eq.s32.totalorder %s14, 1
    %p67 = por %p65, %p66
    %p68 = scmp.ne.s32.totalorder %s59, %s60
    %p69 = scmp.eq.s32.totalorder %s14, 0
    %p70 = por %p68, %p69
    %p71 = scmp.ne.s32.totalorder %s59, %s60
    %p72 = scmp.eq.s32.totalorder %s15, 1
    %p73 = por %p71, %p72
    %p75 = scmp.ne.s32.totalorder %s60, %s74
    %p76 = scmp.eq.s32.totalorder %s15, 0
    %p77 = por %p75, %p76
    %s79 = sadd.s32 %s78, 1
    %p82 = scmp.eq.s32.totalorder %s9, 1
    %p83 = scmp.ne.s32.totalorder %s78, %s80
    %p84 = scmp.eq.s32.totalorder %s9, 0
    %p85 = por %p83, %p84
    %p86 = scmp.ne.s32.totalorder %s78, %s80
    %p87 = scmp.eq.s32.totalorder %s14, 1
    %p88 = por %p86, %p87
    %p89 = scmp.ne.s32.totalorder %s80, %s81
    %p90 = scmp.eq.s32.totalorder %s14, 0
    %p91 = por %p89, %p90
    %p92 = scmp.ne.s32.totalorder %s80, %s81
    %p93 = scmp.eq.s32.totalorder %s15, 1
    %p94 = por %p92, %p93
    %p96 = scmp.ne.s32.totalorder %s81, %s95
    %p97 = scmp.eq.s32.totalorder %s15, 0
    %p98 = por %p96, %p97
    %s99 = ssub.s32 %s16, %s28
    %s100 = ssub.s32 %s17, %s24
    %s101 = sor.u32 %s99, %s100
    %p102 = scmp.eq.s32.totalorder %s101, 0
    %s104 = sadd.s32 %s103, 1
    %s105 = scalar_select %p102, %s103, %s104
    %p108 = pneg %p102
    %p109 = scmp.eq.s32.totalorder %s9, 1
    %p110 = por %p108, %p109
    %p111 = scmp.ne.s32.totalorder %s103, %s106
    %p112 = scmp.eq.s32.totalorder %s9, 0
    %p113 = por %p111, %p112
    %p114 = scmp.ne.s32.totalorder %s103, %s106
    %p115 = scmp.eq.s32.totalorder %s14, 1
    %p116 = por %p114, %p115
    %p117 = scmp.ne.s32.totalorder %s106, %s107
    %p118 = scmp.eq.s32.totalorder %s14, 0
    %p119 = por %p117, %p118
    %p120 = scmp.ne.s32.totalorder %s106, %s107
    %p121 = scmp.eq.s32.totalorder %s15, 1
    %p122 = por %p120, %p121
    %p124 = scmp.ne.s32.totalorder %s107, %s123
    %p125 = scmp.eq.s32.totalorder %s15, 0
    %p126 = por %p124, %p125
    %p127 = scmp.le.s32.totalorder 1, %s9
    %p128 = scmp.lt.s32.totalorder %s9, 3
    %p129 = pnand %p127, %p128
    %p130 = pneg %p129
    // Predicated region
    $region9: #{tpu_custom_call.1} parent=5 // pred_check
      _
    $region10: #{tpu_custom_call.1} parent=5 // pred_check_branch
      %132 = sbr.rel (%p129) target = $region12
    $region11: #{tpu_custom_call.1} parent=5 // pred_region
      %s133 = ssub.s32 %s9, 1
      // Predicated region
      $region13: #{tpu_custom_call.1} parent=11 // pred_check
        %p134 = pneg %p70
      $region14: #{tpu_custom_call.1} parent=11 // pred_check_branch
        %136 = sbr.rel (%p134) target = $region16
      $region15: #{tpu_custom_call.1} parent=11 // pred_region
        _
      $region16: #{tpu_custom_call.1} parent=11 // pred_fallthru
        _
      // Predicated region
      $region17: #{tpu_custom_call.1} parent=11 // pred_check
        %p137 = pneg %p91
      $region18: #{tpu_custom_call.1} parent=11 // pred_check_branch
        %139 = sbr.rel (%p137) target = $region20
      $region19: #{tpu_custom_call.1} parent=11 // pred_region
        _
      $region20: #{tpu_custom_call.1} parent=11 // pred_fallthru
        _
    $region12: #{tpu_custom_call.1} parent=5 // pred_fallthru
      _
    %p140 = scmp.lt.s32.totalorder %s9, 2
    // Predicated region
    $region21: #{tpu_custom_call.1} parent=5 // pred_check
      %p141 = pneg %p140
    $region22: #{tpu_custom_call.1} parent=5 // pred_check_branch
      %143 = sbr.rel (%p141) target = $region24
    $region23: #{tpu_custom_call.1} parent=5 // pred_region
      // Predicated region
      $region25: #{tpu_custom_call.1} parent=23 // pred_check
        %p144 = pneg %p43
      $region26: #{tpu_custom_call.1} parent=23 // pred_check_branch
        %146 = sbr.rel (%p144) target = $region28
      $region27: #{tpu_custom_call.1} parent=23 // pred_region
        %p147 = scmp.lt.s32.totalorder %s16, 1
        %s148 = scalar_select %p147, %s16, 1
        %p149 = scmp.lt.s32.totalorder %s17, 0
        %s150 = scalar_select %p149, %s17, 0
        %s151 = smul.addr %s148, 18
        %s152 = sadd.s32 %s150, %s151
        %s153 = smul.addr %s152, 4
        %s154 = scalar_lea.vmem %s0, %s153
      $region28: #{tpu_custom_call.1} parent=23 // pred_fallthru
        _
    $region24: #{tpu_custom_call.1} parent=5 // pred_fallthru
      _
    %p155 = scmp.le.s32.totalorder 1, %s9
    %p156 = scmp.lt.s32.totalorder %s9, 3
    %p157 = pnand %p155, %p156
    %p158 = pneg %p157
    // Predicated region
    $region29: #{tpu_custom_call.1} parent=5 // pred_check
      _
    $region30: #{tpu_custom_call.1} parent=5 // pred_check_branch
      %160 = sbr.rel (%p157) target = $region32
    $region31: #{tpu_custom_call.1} parent=5 // pred_region
      %s161 = ssub.s32 %s9, 1
      %p162 = scmp.lt.s32.totalorder %s18, 1
      %s163 = scalar_select %p162, %s18, 1
      %p164 = scmp.lt.s32.totalorder %s19, 0
      %s165 = scalar_select %p164, %s19, 0
      %s166 = smul.addr %s163, 18
      %s167 = sadd.s32 %s165, %s166
      %s168 = smul.addr %s167, 4
      %s169 = scalar_lea.vmem %s0, %s168
      %p170 = pneg %p49
      %p171 = pneg %p46
      %p172 = pneg %p70
      %p173 = pneg %p67
      %p174 = pneg %p91
      %p175 = pneg %p88
      %p176 = pneg %p119
      %p177 = pneg %p116
      %p178 = scmp.lt.s32.totalorder %s18, 1
      %s179 = scalar_select %p178, %s18, 1
      %p180 = scmp.lt.s32.totalorder %s19, 0
      %s181 = scalar_select %p180, %s19, 0
      %s182 = smul.addr %s179, 2
      %s183 = sadd.s32 %s181, %s182
      %s184 = smul.addr %s183, 8
      %s185 = scalar_lea.vmem %s3, %s184
      %p186 = scmp.lt.s32.totalorder %s18, 1
      %s187 = scalar_select %p186, %s18, 1
      %p188 = scmp.lt.s32.totalorder %s19, 0
      %s189 = scalar_select %p188, %s19, 0
      %s190 = smul.addr %s187, 18
      %s191 = sadd.s32 %s189, %s190
      %s192 = smul.addr %s191, 4
      %s193 = scalar_lea.vmem %s0, %s192
      %p194 = scmp.lt.s32.totalorder %s18, 1
      %s195 = scalar_select %p194, %s18, 1
      %p196 = scmp.lt.s32.totalorder %s19, 0
      %s197 = scalar_select %p196, %s19, 0
      %s198 = smul.addr %s195, 2
      %s199 = sadd.s32 %s197, %s198
      %s200 = smul.addr %s199, 8
      %s201 = scalar_lea.vmem %s3, %s200
      %v203 = vld [vmem:[%s193] sm:$0xf]
      %v204 = vld [vmem:[%s193 + $0x4] sm:$0xf]
      %v205 = vld [vmem:[%s193 + $0x8] sm:$0xf]
      %v206 = vld [vmem:[%s193 + $0xc] sm:$0xf]
      %v207 = vld [vmem:[%s193 + $0x10] sm:$0xf]
      %v208 = vld [vmem:[%s193 + $0x14] sm:$0xf]
      %v209 = vld [vmem:[%s193 + $0x18] sm:$0xf]
      %v210 = vld [vmem:[%s193 + $0x1c] sm:$0xf]
      %v211 = vld [vmem:[%s193 + $0x20] sm:$0xf]
      %v212 = vld [vmem:[%s193 + $0x24] sm:$0xf]
      %v213 = vunpack.c.l.bf16 %v203
      %v214 = vunpack.c.l.bf16 %v204
      %v215 = vunpack.c.l.bf16 %v205
      %v216 = vunpack.c.l.bf16 %v206
      %v217 = vunpack.c.l.bf16 %v207
      %v218 = vunpack.c.l.bf16 %v208
      %v219 = vunpack.c.l.bf16 %v209
      %v220 = vunpack.c.l.bf16 %v210
      %v221 = vunpack.c.l.bf16 %v211
      %v222 = vunpack.c.l.bf16 %v212
      %vm223 = vcmp.eq.f32.partialorder %v213, -inf
      %vm224 = vcmp.eq.f32.partialorder %v214, -inf
      %vm225 = vcmp.eq.f32.partialorder %v215, -inf
      %vm226 = vcmp.eq.f32.partialorder %v216, -inf
      %vm227 = vcmp.eq.f32.partialorder %v217, -inf
      %vm228 = vcmp.eq.f32.partialorder %v218, -inf
      %vm229 = vcmp.eq.f32.partialorder %v219, -inf
      %vm230 = vcmp.eq.f32.partialorder %v220, -inf
      %vm231 = vcmp.eq.f32.partialorder %v221, -inf
      %vm232 = vcmp.eq.f32.partialorder %v222, -inf
      %vm233 = vmpackc.low %vm223, %vm223
      %vm234 = vmpackc.low %vm224, %vm224
      %vm235 = vmpackc.low %vm225, %vm225
      %vm236 = vmpackc.low %vm226, %vm226
      %vm237 = vmpackc.low %vm227, %vm227
      %vm238 = vmpackc.low %vm228, %vm228
      %vm239 = vmpackc.low %vm229, %vm229
      %vm240 = vmpackc.low %vm230, %vm230
      %vm241 = vmpackc.low %vm231, %vm231
      %vm242 = vmpackc.low %vm232, %vm232
      %v243 = vsel %vm233, 0, %v203
      %v244 = vsel %vm234, 0, %v204
      %v245 = vsel %vm235, 0, %v205
      %v246 = vsel %vm236, 0, %v206
      %v247 = vsel %vm237, 0, %v207
      %v248 = vsel %vm238, 0, %v208
      %v249 = vsel %vm239, 0, %v209
      %v250 = vsel %vm240, 0, %v210
      %v251 = vsel %vm241, 0, %v211
      %v252 = vsel %vm242, 0, %v212
      %v253 = vld [vmem:[%s1] sm:$0xf]
      %v254 = vld [vmem:[%s1] sm:$0xff]
      %v255 = vld [vmem:[%s193 + $0x28] sm:$0xf]
      %v256 = vld [vmem:[%s193 + $0x2c] sm:$0xf]
      %v257 = vld [vmem:[%s193 + $0x30] sm:$0xf]
      %v258 = vld [vmem:[%s193 + $0x34] sm:$0xf]
      %v259 = vld [vmem:[%s193 + $0x38] sm:$0xf]
      %v260 = vld [vmem:[%s193 + $0x3c] sm:$0xf]
      %v261 = vld [vmem:[%s193 + $0x40] sm:$0xf]
      %v262 = vld [vmem:[%s193 + $0x44] sm:$0xf]
      %v264 = vunpack.c.l.b16 %v254
      %v265 = vunpack.c.h.b16 %v254
      %v266 = vpack.c.b16 %v264, %v264
      %v267 = vpack.c.b16 %v265, %v265
      %268 = vrot.lane.b32.xlu0 %v266, 48
      %v269 = vpop.permute.xlu0 %268
      %270 = vrot.lane.b32.xlu0 %v267, 48
      %v271 = vpop.permute.xlu0 %270
      %vm272 = vcmask 392192
      %v273 = vsel %vm272, %v269, %v271
      %v282 = vunpack.c.l.b16 %v255
      %v283 = vunpack.c.l.b16 %v256
      %v284 = vunpack.c.l.b16 %v257
      %v285 = vunpack.c.l.b16 %v258
      %v286 = vunpack.c.l.b16 %v259
      %v287 = vunpack.c.l.b16 %v260
      %v288 = vunpack.c.l.b16 %v261
      %v289 = vunpack.c.l.b16 %v262
      %v290 = vpack.c.b16 %v283, %v282
      %v291 = vpack.c.b16 %v285, %v284
      %v292 = vpack.c.b16 %v287, %v286
      %v293 = vpack.c.b16 %v289, %v288
      %vm298 = vcmask 523264
      %v300 = vsel %vm298, %v273, 0
      %302 = vmatpush.bf16.msra.mxu0 0
      %303 = vmatpush.bf16.msra.mxu0 0
      %304 = vmatpush.bf16.msra.mxu0 0
      %305 = vmatpush.bf16.msra.mxu0 0
      %306 = vmatpush.bf16.msra.mxu0 %v293
      %307 = vmatpush.bf16.msra.mxu0 %v292
      %308 = vmatpush.bf16.msra.mxu0 %v291
      %309 = vmatpush.bf16.msra.mxu0 %v290
      %310 = vmatmul.bf16.gmra.mxu0 %v300
      %v311 = vpop.f32.mrf.mxu0
      %v312 = vadd.f32 0.0, %v311
      %v313 = vpop.f32.mrf.mxu0
      %314 = vdwg.mxu0
      %v325 = vunpack.c.l.b16 %v243
      %v326 = vunpack.c.l.b16 %v244
      %v327 = vunpack.c.l.b16 %v245
      %v328 = vunpack.c.l.b16 %v246
      %v329 = vunpack.c.l.b16 %v247
      %v330 = vunpack.c.l.b16 %v248
      %v331 = vunpack.c.l.b16 %v249
      %v332 = vunpack.c.l.b16 %v250
      %v333 = vunpack.c.l.b16 %v251
      %v334 = vunpack.c.l.b16 %v252
      %v335 = vpack.c.b16 %v326, %v325
      %v336 = vpack.c.b16 %v328, %v327
      %v337 = vpack.c.b16 %v330, %v329
      %v338 = vpack.c.b16 %v332, %v331
      %v339 = vpack.c.b16 %v334, %v333
      %vm345 = vcmask 654336
      %v347 = vsel %vm345, %v253, 0
      %349 = vmatpush.bf16.msra.mxu0 0
      %350 = vmatpush.bf16.msra.mxu0 0
      %351 = vmatpush.bf16.msra.mxu0 0
      %352 = vmatpush.bf16.msra.mxu0 %v339
      %353 = vmatpush.bf16.msra.mxu0 %v338
      %354 = vmatpush.bf16.msra.mxu0 %v337
      %355 = vmatpush.bf16.msra.mxu0 %v336
      %356 = vmatpush.bf16.msra.mxu0 %v335
      %357 = vmatmul.bf16.gmra.mxu0 %v347
      %v358 = vpop.f32.mrf.mxu0
      %v359 = vadd.f32 %v312, %v358
      %v360 = vpop.f32.mrf.mxu0
      %361 = vdwg.mxu0
      %v362 = vld [vmem:[%s2] sm:$0xff]
      %364 = vset.pattern.permute.xlu0 0
      %365 = vperm.xlu0 %364, %v362
      %v366 = vpop.permute.xlu0 %365
      %v368 = vadd.f32 %v359, %v366
      %v369 = vmax.f32 %v368, 0.0
      %370 = vst.msk [vmem:[%s201] sm:$0xff] %vm298, %v369
      %v371 = vld [vmem:[%s193] sm:$0x3]
      %v372 = vld [vmem:[%s193 + $0x8] sm:$0x3]
      %v373 = vunpack.c.l.bf16 %v371
      %v374 = vunpack.c.l.bf16 %v372
      %v375 = vmax.f32 %v373, %v374
      %v376 = vpack.c.bf16 %v375, %v375
      %v377 = vld [vmem:[%s193 + $0x10] sm:$0x3]
      %v378 = vunpack.c.l.bf16 %v376
      %v379 = vunpack.c.l.bf16 %v377
      %v380 = vmax.f32 %v378, %v379
      %v381 = vpack.c.bf16 %v380, %v380
      %v382 = vld [vmem:[%s193 + $0x18] sm:$0x3]
      %v383 = vunpack.c.l.bf16 %v381
      %v384 = vunpack.c.l.bf16 %v382
      %v385 = vmax.f32 %v383, %v384
      %v386 = vpack.c.bf16 %v385, %v385
      %v387 = vld [vmem:[%s193 + $0x20] sm:$0x3]
      %v388 = vunpack.c.l.bf16 %v386
      %v389 = vunpack.c.l.bf16 %v387
      %v390 = vmax.f32 %v388, %v389
      %v391 = vpack.c.bf16 %v390, %v390
      %v392 = vld [vmem:[%s193 + $0x28] sm:$0x3]
      %v393 = vunpack.c.l.bf16 %v391
      %v394 = vunpack.c.l.bf16 %v392
      %v395 = vmax.f32 %v393, %v394
      %v396 = vpack.c.bf16 %v395, %v395
      %v397 = vld [vmem:[%s193 + $0x30] sm:$0x3]
      %v398 = vunpack.c.l.bf16 %v396
      %v399 = vunpack.c.l.bf16 %v397
      %v400 = vmax.f32 %v398, %v399
      %v401 = vpack.c.bf16 %v400, %v400
      %v402 = vld [vmem:[%s193 + $0x38] sm:$0x3]
      %v403 = vunpack.c.l.bf16 %v401
      %v404 = vunpack.c.l.bf16 %v402
      %v405 = vmax.f32 %v403, %v404
      %v406 = vpack.c.bf16 %v405, %v405
      %v407 = vld [vmem:[%s193 + $0x40] sm:$0x3]
      %v408 = vunpack.c.l.bf16 %v406
      %v409 = vunpack.c.l.bf16 %v407
      %v410 = vmax.f32 %v408, %v409
      %v411 = vpack.c.bf16 %v410, %v410
      %v412 = vunpack.c.l.bf16 %v411
      %vm413 = vcmask 519168
      %414 = vst.msk [vmem:[%s201 + $0x8] sm:$0xf] %vm413, %v412
      %p415 = scmp.lt.s32.totalorder %s18, 1
      %s416 = scalar_select %p415, %s18, 1
      %p417 = scmp.lt.s32.totalorder %s19, 0
      %s418 = scalar_select %p417, %s19, 0
      %s419 = smul.addr %s416, 2
      %s420 = sadd.s32 %s418, %s419
      %s421 = smul.addr %s420, 8
      %s422 = scalar_lea.vmem %s3, %s421
      // Predicated region
      $region33: #{tpu_custom_call.1} parent=31 // pred_check
        %p423 = pneg %p116
      $region34: #{tpu_custom_call.1} parent=31 // pred_check_branch
        %425 = sbr.rel (%p423) target = $region36
      $region35: #{tpu_custom_call.1} parent=31 // pred_region
        _
      $region36: #{tpu_custom_call.1} parent=31 // pred_fallthru
        _
    $region32: #{tpu_custom_call.1} parent=5 // pred_fallthru
      _
    %p426 = scmp.le.s32.totalorder 2, %s9
    // Predicated region
    $region37: #{tpu_custom_call.1} parent=5 // pred_check
      %p427 = pneg %p426
    $region38: #{tpu_custom_call.1} parent=5 // pred_check_branch
      %429 = sbr.rel (%p427) target = $region40
    $region39: #{tpu_custom_call.1} parent=5 // pred_region
      %s430 = ssub.s32 %s9, 2
      // Predicated region
      $region41: #{tpu_custom_call.1} parent=39 // pred_check
        %p431 = pneg %p122
      $region42: #{tpu_custom_call.1} parent=39 // pred_check_branch
        %433 = sbr.rel (%p431) target = $region44
      $region43: #{tpu_custom_call.1} parent=39 // pred_region
        %p434 = scmp.lt.s32.totalorder %s20, 1
        %s435 = scalar_select %p434, %s20, 1
        %p436 = scmp.lt.s32.totalorder %s21, 0
        %s437 = scalar_select %p436, %s21, 0
        %s438 = smul.addr %s435, 2
        %s439 = sadd.s32 %s437, %s438
        %s440 = smul.addr %s439, 8
        %s441 = scalar_lea.vmem %s3, %s440
      $region44: #{tpu_custom_call.1} parent=39 // pred_fallthru
        _
    $region40: #{tpu_custom_call.1} parent=5 // pred_fallthru
      _
  $region6: #{tpu_custom_call.1} parent=0 // loop_footer
    %s13 = sadd.s32 1, %s9
  $region7: #{tpu_custom_call.1} parent=0 // loop_footer_branch
    %8 = sbr.rel target = $region3
  $region8: #{tpu_custom_call.1} parent=0 // loop_exit
    _

</llo_original>
